<compile_context>
chip_gen: v6e
topology: v6e:2x2x1
jax: 0.10.0
libtpu: 0.0.40
codegen_flags: <defaults>
</compile_context>

<pallas_src>
import functools
import math

import jax
import jax.numpy as jnp
from jax import lax
from jax.experimental import pallas as pl
from jax.experimental.pallas import tpu as pltpu

LN_EPS = 1e-5  # PyTorch nn.LayerNorm default


def _round_up(n, m):
    return ((n + m - 1) // m) * m


def _pick_fold(S, C):
    """Fold consecutive S positions into the lane dim (lane-dense repack).

    The fold must divide S exactly so the wrapper reshape is a free bitcast
    (no jnp.pad / extra HBM pass over x).
    """
    if C >= 128 or 128 % C != 0:
        # C is already lane-dense (multiple of 128) or doesn't divide 128.
        # TODO(synk): for C that neither reaches nor divides 128, repack C up to a
        # multiple of 128 for dense lanes; fold=1 is correct but lane-sparse.
        return 1
    return max(1, math.gcd(128 // C, S))


def mean_pooler_kernel(x_ref, gamma_ref, beta_ref, w_ref, b_ref, o_ref, acc_ref,
                       *, inv_s, fold, c, rem):
    # x_ref:      (TB, TS, FC) lane-dense repacked x tile (FC = fold * C)
    # gamma/beta: (1, C), w: (C, K), b: (1, K)   -- constant index maps, VMEM-resident
    # o_ref:      (TB, K)
    # acc_ref:    (TB, FC) f32 scratch, accumulates the sequence SUM across S tiles
    # rem:        static number of valid rows in the last S tile (0 => all tiles full)
    si = pl.program_id(1)
    last = pl.num_programs(1) - 1

    @pl.when(si == 0)
    def _():
        acc_ref[...] = jnp.zeros_like(acc_ref)

    if rem == 0:
        # Every S tile is fully valid: plain sublane reduction over TS.
        acc_ref[...] += jnp.sum(x_ref[...].astype(jnp.float32), axis=1)
    else:
        # Ragged tail: last tile extends past the array; only accumulate the `rem`
        # valid rows (static slice -> no iota/select cost on the full tiles).
        @pl.when(si != last)
        def _():
            acc_ref[...] += jnp.sum(x_ref[...].astype(jnp.float32), axis=1)

        @pl.when(si == last)
        def _():
            acc_ref[...] += jnp.sum(x_ref[:, :rem, :].astype(jnp.float32), axis=1)

    @pl.when(si == last)
    def _():
        acc = acc_ref[...]                       # (TB, FC)
        # Fold the `fold` C-groups (static lane slices) -> per-channel sequence sum.
        pooled = acc[:, 0:c]
        for g in range(1, fold):
            pooled = pooled + acc[:, g * c:(g + 1) * c]
        pooled = pooled * inv_s                  # sum -> mean over the true S

        # LayerNorm over C (biased variance, matching PyTorch).
        mu = jnp.mean(pooled, axis=-1, keepdims=True)
        diff = pooled - mu
        var = jnp.mean(diff * diff, axis=-1, keepdims=True)
        y = diff * lax.rsqrt(var + LN_EPS) * gamma_ref[...] + beta_ref[...]

        # Linear: y @ W + b (tiny MXU matmul; off the DMA critical path).
        out = jnp.dot(y, w_ref[...], preferred_element_type=jnp.float32)
        out = out + b_ref[...]
        o_ref[...] = out.astype(o_ref.dtype)


def mean_pooler(x, gamma, beta, w, b, *, tb=8, ts_max=2048,
                tile_budget_bytes=8 * 1024 * 1024,
                vmem_limit_bytes=48 * 1024 * 1024):
    """x: (B, S, C); returns (B, num_classes) float32.

    w is (C, K), i.e. the transpose of PyTorch nn.Linear.weight.
    x may be float32 or bfloat16 (accumulation is always f32).
    """
    B, S, C = x.shape
    K = w.shape[1]

    # --- lane-dense repack: fold consecutive S positions into the lane dim.
    # fold divides S by construction => free bitcast reshape, NO pad, NO copy.
    fold = _pick_fold(S, C)
    fc = fold * C
    s_fold = S // fold
    x = x.reshape(B, s_fold, fc)

    # --- batch tiling (no pad; ragged last batch tile handled by OOB-write drop).
    if B <= tb:
        tb = B                       # block == full dim, single batch tile
    else:
        tb = max(8, (tb // 8) * 8)   # keep the output block sublane-aligned

    # --- S tiling: biggest tile within the per-buffer VMEM budget (accounts for
    # lane padding when fc < 128), multiple of 8, capped at ts_max.
    itemsize = jnp.dtype(x.dtype).itemsize
    fc_vmem = _round_up(fc, 128)
    ts_cap = max(8, (tile_budget_bytes // (tb * fc_vmem * itemsize)) // 8 * 8)
    ts_max = max(8, (ts_max // 8) * 8)
    ts = max(8, min(ts_cap, ts_max, _round_up(s_fold, 8)))
    rem = s_fold % ts                # valid rows in the (possibly partial) last S tile

    grid = (pl.cdiv(B, tb), pl.cdiv(s_fold, ts))

    kernel = functools.partial(
        mean_pooler_kernel, inv_s=1.0 / S, fold=fold, c=C, rem=rem)

    out = pl.pallas_call(
        kernel,
        out_shape=jax.ShapeDtypeStruct((B, K), jnp.float32),
        grid_spec=pltpu.PrefetchScalarGridSpec(
            num_scalar_prefetch=0,
            grid=grid,
            in_specs=[
                pl.BlockSpec((tb, ts, fc), lambda bi, si: (bi, si, 0)),
                pl.BlockSpec((1, C), lambda bi, si: (0, 0)),
                pl.BlockSpec((1, C), lambda bi, si: (0, 0)),
                pl.BlockSpec((C, K), lambda bi, si: (0, 0)),
                pl.BlockSpec((1, K), lambda bi, si: (0, 0)),
            ],
            out_specs=pl.BlockSpec((tb, K), lambda bi, si: (bi, 0)),
            scratch_shapes=[pltpu.VMEM((tb, fc), jnp.float32)],
        ),
        compiler_params=pltpu.CompilerParams(
            # S axis MUST stay "arbitrary": the acc_ref accumulator is sequential.
            dimension_semantics=("parallel", "arbitrary"),
            # Explicit limit is load-bearing on v5e (16 MiB scoped default) and stays
            # under v7x's 64 MiB physical VMEM.
            vmem_limit_bytes=vmem_limit_bytes,
        ),
    )(x, gamma.reshape(1, C), beta.reshape(1, C), w, b.reshape(1, K))

    return out


def mean_pooler_ref(x, gamma, beta, w, b):
    pooled = jnp.mean(x.astype(jnp.float32), axis=1)
    mu = jnp.mean(pooled, axis=-1, keepdims=True)
    var = jnp.mean((pooled - mu) ** 2, axis=-1, keepdims=True)
    y = (pooled - mu) / jnp.sqrt(var + LN_EPS) * gamma + beta
    return y @ w + b


if __name__ == "__main__":
    # Small shapes consistent with the forward: x (B, S, C), in_channels=C.
    B, S, C, NUM_CLASSES = 2, 8, 32, 2

    key = jax.random.PRNGKey(0)
    kx, kw, kb, kg, kbeta = jax.random.split(key, 5)

    x = jax.random.normal(kx, (B, S, C), dtype=jnp.float32)

    # Deterministic parameter init (synthetic, not a checkpoint load).
    gamma = 1.0 + 0.01 * jax.random.normal(kg, (C,), dtype=jnp.float32)   # LayerNorm weight
    beta = 0.01 * jax.random.normal(kbeta, (C,), dtype=jnp.float32)       # LayerNorm bias
    w = jax.random.normal(kw, (C, NUM_CLASSES), dtype=jnp.float32) / jnp.sqrt(C)  # Linear W^T
    b = 0.01 * jax.random.normal(kb, (NUM_CLASSES,), dtype=jnp.float32)   # Linear bias

    out = mean_pooler(x, gamma, beta, w, b)
    jax.block_until_ready(out)
    ref = mean_pooler_ref(x, gamma, beta, w, b)
    assert out.shape == (B, NUM_CLASSES), out.shape
    assert jnp.allclose(out, ref, atol=1e-5, rtol=1e-5), (out, ref)

    # Ragged S (S % 4 != 0 -> fold=2, still zero-copy), masked S tail, small odd batch.
    B2, S2 = 3, 1042
    x2 = jax.random.normal(jax.random.PRNGKey(1), (B2, S2, C), dtype=jnp.float32)
    out2 = mean_pooler(x2, gamma, beta, w, b)
    jax.block_until_ready(out2)
    ref2 = mean_pooler_ref(x2, gamma, beta, w, b)
    assert out2.shape == (B2, NUM_CLASSES), out2.shape
    assert jnp.allclose(out2, ref2, atol=1e-4, rtol=1e-4), (out2, ref2)

    # Multi-S-tile accumulation + masked last S tile + ragged (partial) batch tile.
    B3, S3 = 11, 1000
    x3 = jax.random.normal(jax.random.PRNGKey(2), (B3, S3, C), dtype=jnp.float32)
    out3 = mean_pooler(x3, gamma, beta, w, b, ts_max=64)
    jax.block_until_ready(out3)
    ref3 = mean_pooler_ref(x3, gamma, beta, w, b)
    assert out3.shape == (B3, NUM_CLASSES), out3.shape
    assert jnp.allclose(out3, ref3, atol=1e-4, rtol=1e-4), (out3, ref3)

    print("KERNEL_OK")
</pallas_src>

<mosaic_0001>
module attributes {stable_mosaic.version = 11 : i64} {
  func.func @mean_pooler_kernel(%arg0: i32, %arg1: i32, %arg2: memref<2x8x128xf32, #tpu.memory_space<vmem>>, %arg3: memref<1x32xf32, #tpu.memory_space<vmem>>, %arg4: memref<1x32xf32, #tpu.memory_space<vmem>>, %arg5: memref<32x2xf32, #tpu.memory_space<vmem>>, %arg6: memref<1x2xf32, #tpu.memory_space<vmem>>, %arg7: memref<2x2xf32, #tpu.memory_space<vmem>>, %arg8: memref<2x128xf32, #tpu.memory_space<vmem>>) attributes {dimension_semantics = [#tpu.dimension_semantics<parallel>, #tpu.dimension_semantics<arbitrary>], iteration_bounds = array<i64: 1, 1>, scalar_prefetch = 0 : i64, scratch_operands = 1 : i64, tpu.core_type = #tpu.core_type<tc>, window_params = [{transform_indices = @transform_0, window_bounds = array<i64: 2, 8, 128>}, {pipeline_mode = #tpu.pipeline_mode<synchronous>, transform_indices = @transform_1, window_bounds = array<i64: 1, 32>}, {pipeline_mode = #tpu.pipeline_mode<synchronous>, transform_indices = @transform_2, window_bounds = array<i64: 1, 32>}, {pipeline_mode = #tpu.pipeline_mode<synchronous>, transform_indices = @transform_3, window_bounds = array<i64: 32, 2>}, {pipeline_mode = #tpu.pipeline_mode<synchronous>, transform_indices = @transform_4, window_bounds = array<i64: 1, 2>}, {transform_indices = @transform_5, window_bounds = array<i64: 2, 2>}]} {
    %c0_i32 = arith.constant 0 : i32
    %0 = arith.cmpi eq, %arg1, %c0_i32 : i32
    %1 = arith.extui %0 : i1 to i32
    %c0_i32_0 = arith.constant 0 : i32
    %2 = arith.cmpi ne, %1, %c0_i32_0 : i32
    scf.if %2 {
      %cst = arith.constant 0.000000e+00 : f32
      %12 = vector.broadcast %cst : f32 to vector<2x128xf32>
      %c0 = arith.constant 0 : index
      %c0_7 = arith.constant 0 : index
      %13 = vector.load %arg8[%c0, %c0_7] : memref<2x128xf32, #tpu.memory_space<vmem>>, vector<2x128xf32>
      tpu.vector_store %arg8[%c0, %c0_7], %12 {strides = array<i32>} : memref<2x128xf32, #tpu.memory_space<vmem>>, vector<2x128xf32>,
    } else {
    }
    %c0_i32_1 = arith.constant 0 : i32
    %3 = arith.cmpi ne, %arg1, %c0_i32_1 : i32
    %4 = arith.extui %3 : i1 to i32
    %c0_i32_2 = arith.constant 0 : i32
    %5 = arith.cmpi ne, %4, %c0_i32_2 : i32
    scf.if %5 {
      %c0 = arith.constant 0 : index
      %c0_7 = arith.constant 0 : index
      %12 = vector.load %arg8[%c0, %c0_7] : memref<2x128xf32, #tpu.memory_space<vmem>>, vector<2x128xf32>
      %c0_8 = arith.constant 0 : index
      %c0_9 = arith.constant 0 : index
      %c0_10 = arith.constant 0 : index
      %13 = vector.load %arg2[%c0_8, %c0_9, %c0_10] : memref<2x8x128xf32, #tpu.memory_space<vmem>>, vector<2x8x128xf32>
      %cst = arith.constant dense<0.000000e+00> : vector<2x128xf32>
      %14 = vector.multi_reduction <add>, %13, %cst [1] : vector<2x8x128xf32> to vector<2x128xf32>
      %15 = arith.addf %12, %14 : vector<2x128xf32>
      %c0_11 = arith.constant 0 : index
      %c0_12 = arith.constant 0 : index
      %16 = vector.load %arg8[%c0_11, %c0_12] : memref<2x128xf32, #tpu.memory_space<vmem>>, vector<2x128xf32>
      tpu.vector_store %arg8[%c0_11, %c0_12], %15 {strides = array<i32>} : memref<2x128xf32, #tpu.memory_space<vmem>>, vector<2x128xf32>,
    } else {
    }
    %c0_i32_3 = arith.constant 0 : i32
    %6 = arith.cmpi eq, %arg1, %c0_i32_3 : i32
    %7 = arith.extui %6 : i1 to i32
    %c0_i32_4 = arith.constant 0 : i32
    %8 = arith.cmpi ne, %7, %c0_i32_4 : i32
    scf.if %8 {
      %c0 = arith.constant 0 : index
      %c0_7 = arith.constant 0 : index
      %12 = vector.load %arg8[%c0, %c0_7] : memref<2x128xf32, #tpu.memory_space<vmem>>, vector<2x128xf32>
      %c0_8 = arith.constant 0 : index
      %c0_9 = arith.constant 0 : index
      %c0_10 = arith.constant 0 : index
      %13 = vector.load %arg2[%c0_8, %c0_9, %c0_10] : memref<2x8x128xf32, #tpu.memory_space<vmem>>, vector<2x2x128xf32>
      %cst = arith.constant dense<0.000000e+00> : vector<2x128xf32>
      %14 = vector.multi_reduction <add>, %13, %cst [1] : vector<2x2x128xf32> to vector<2x128xf32>
      %15 = arith.addf %12, %14 : vector<2x128xf32>
      %c0_11 = arith.constant 0 : index
      %c0_12 = arith.constant 0 : index
      %16 = vector.load %arg8[%c0_11, %c0_12] : memref<2x128xf32, #tpu.memory_space<vmem>>, vector<2x128xf32>
      tpu.vector_store %arg8[%c0_11, %c0_12], %15 {strides = array<i32>} : memref<2x128xf32, #tpu.memory_space<vmem>>, vector<2x128xf32>,
    } else {
    }
    %c0_i32_5 = arith.constant 0 : i32
    %9 = arith.cmpi eq, %arg1, %c0_i32_5 : i32
    %10 = arith.extui %9 : i1 to i32
    %c0_i32_6 = arith.constant 0 : i32
    %11 = arith.cmpi ne, %10, %c0_i32_6 : i32
    scf.if %11 {
      %c0 = arith.constant 0 : index
      %c0_7 = arith.constant 0 : index
      %12 = vector.load %arg8[%c0, %c0_7] : memref<2x128xf32, #tpu.memory_space<vmem>>, vector<2x128xf32>
      %13 = vector.extract_strided_slice %12 {offsets = [0, 0], sizes = [2, 32], strides = [1, 1]} : vector<2x128xf32> to vector<2x32xf32>
      %14 = vector.extract_strided_slice %12 {offsets = [0, 32], sizes = [2, 32], strides = [1, 1]} : vector<2x128xf32> to vector<2x32xf32>
      %15 = arith.addf %13, %14 : vector<2x32xf32>
      %16 = vector.extract_strided_slice %12 {offsets = [0, 64], sizes = [2, 32], strides = [1, 1]} : vector<2x128xf32> to vector<2x32xf32>
      %17 = arith.addf %15, %16 : vector<2x32xf32>
      %18 = vector.extract_strided_slice %12 {offsets = [0, 96], sizes = [2, 32], strides = [1, 1]} : vector<2x128xf32> to vector<2x32xf32>
      %19 = arith.addf %17, %18 : vector<2x32xf32>
      %cst = arith.constant 1.250000e-01 : f32
      %20 = vector.broadcast %cst : f32 to vector<2x32xf32>
      %21 = arith.mulf %19, %20 : vector<2x32xf32>
      %cst_8 = arith.constant dense<0.000000e+00> : vector<2xf32>
      %22 = vector.multi_reduction <add>, %21, %cst_8 [1] : vector<2x32xf32> to vector<2xf32>
      %23 = vector.shape_cast %22 : vector<2xf32> to vector<2x1xf32>
      %cst_9 = arith.constant 3.200000e+01 : f32
      %24 = vector.broadcast %cst_9 : f32 to vector<2x1xf32>
      %25 = arith.divf %23, %24 : vector<2x1xf32>
      %26 = vector.broadcast %25 : vector<2x1xf32> to vector<2x32xf32>
      %27 = arith.subf %21, %26 : vector<2x32xf32>
      %28 = arith.mulf %27, %27 : vector<2x32xf32>
      %cst_10 = arith.constant dense<0.000000e+00> : vector<2xf32>
      %29 = vector.multi_reduction <add>, %28, %cst_10 [1] : vector<2x32xf32> to vector<2xf32>
      %30 = vector.shape_cast %29 : vector<2xf32> to vector<2x1xf32>
      %cst_11 = arith.constant 3.200000e+01 : f32
      %31 = vector.broadcast %cst_11 : f32 to vector<2x1xf32>
      %32 = arith.divf %30, %31 : vector<2x1xf32>
      %cst_12 = arith.constant 9.99999974E-6 : f32
      %33 = vector.broadcast %cst_12 : f32 to vector<2x1xf32>
      %34 = arith.addf %32, %33 : vector<2x1xf32>
      %35 = math.rsqrt %34 : vector<2x1xf32>
      %36 = vector.broadcast %35 : vector<2x1xf32> to vector<2x32xf32>
      %37 = arith.mulf %27, %36 : vector<2x32xf32>
      %c0_13 = arith.constant 0 : index
      %c0_14 = arith.constant 0 : index
      %38 = vector.load %arg3[%c0_13, %c0_14] : memref<1x32xf32, #tpu.memory_space<vmem>>, vector<1x32xf32>
      %39 = vector.broadcast %38 : vector<1x32xf32> to vector<2x32xf32>
      %40 = arith.mulf %37, %39 : vector<2x32xf32>
      %c0_15 = arith.constant 0 : index
      %c0_16 = arith.constant 0 : index
      %41 = vector.load %arg4[%c0_15, %c0_16] : memref<1x32xf32, #tpu.memory_space<vmem>>, vector<1x32xf32>
      %42 = vector.broadcast %41 : vector<1x32xf32> to vector<2x32xf32>
      %43 = arith.addf %40, %42 : vector<2x32xf32>
      %c0_17 = arith.constant 0 : index
      %c0_18 = arith.constant 0 : index
      %44 = vector.load %arg5[%c0_17, %c0_18] : memref<32x2xf32, #tpu.memory_space<vmem>>, vector<32x2xf32>
      %cst_19 = arith.constant dense<0.000000e+00> : vector<2x2xf32>
      %45 = tpu.matmul %43, %44, %cst_19 {dimension_numbers = #tpu.dot_dimension_numbers<[1], [0], [0], [1], [0, 0, 1, 1], [], []>} : vector<2x32xf32>, vector<32x2xf32>, vector<2x2xf32> -> vector<2x2xf32>
      %c0_20 = arith.constant 0 : index
      %c0_21 = arith.constant 0 : index
      %46 = vector.load %arg6[%c0_20, %c0_21] : memref<1x2xf32, #tpu.memory_space<vmem>>, vector<1x2xf32>
      %47 = vector.broadcast %46 : vector<1x2xf32> to vector<2x2xf32>
      %48 = arith.addf %45, %47 : vector<2x2xf32>
      %c0_22 = arith.constant 0 : index
      %c0_23 = arith.constant 0 : index
      %49 = vector.load %arg7[%c0_22, %c0_23] : memref<2x2xf32, #tpu.memory_space<vmem>>, vector<2x2xf32>
      tpu.vector_store %arg7[%c0_22, %c0_23], %48 {strides = array<i32>} : memref<2x2xf32, #tpu.memory_space<vmem>>, vector<2x2xf32>,
    } else {
    }
    return
  }
  func.func @transform_0(%arg0: i32, %arg1: i32) -> (i32, i32, i32) {
    %c0_i32 = arith.constant 0 : i32
    %c0_i32_0 = arith.constant 0 : i32
    return %arg0, %arg1, %c0_i32 : i32, i32, i32
  }
  func.func @transform_1(%arg0: i32, %arg1: i32) -> (i32, i32) {
    %c0_i32 = arith.constant 0 : i32
    %c0_i32_0 = arith.constant 0 : i32
    %c0_i32_1 = arith.constant 0 : i32
    return %c0_i32, %c0_i32_0 : i32, i32
  }
  func.func @transform_2(%arg0: i32, %arg1: i32) -> (i32, i32) {
    %c0_i32 = arith.constant 0 : i32
    %c0_i32_0 = arith.constant 0 : i32
    %c0_i32_1 = arith.constant 0 : i32
    return %c0_i32, %c0_i32_0 : i32, i32
  }
  func.func @transform_3(%arg0: i32, %arg1: i32) -> (i32, i32) {
    %c0_i32 = arith.constant 0 : i32
    %c0_i32_0 = arith.constant 0 : i32
    %c0_i32_1 = arith.constant 0 : i32
    return %c0_i32, %c0_i32_0 : i32, i32
  }
  func.func @transform_4(%arg0: i32, %arg1: i32) -> (i32, i32) {
    %c0_i32 = arith.constant 0 : i32
    %c0_i32_0 = arith.constant 0 : i32
    %c0_i32_1 = arith.constant 0 : i32
    return %c0_i32, %c0_i32_0 : i32, i32
  }
  func.func @transform_5(%arg0: i32, %arg1: i32) -> (i32, i32) {
    %c0_i32 = arith.constant 0 : i32
    %c0_i32_0 = arith.constant 0 : i32
    return %arg0, %c0_i32 : i32, i32
  }
}

</mosaic_0001>

<llo_original>
// kernel: tpu_custom_call.1
$region0: #{tpu_custom_call.1}
  #allocation0 [shape = 'u32[]', space=smem, size = 0x4, offset = 0x4, fixed_abs, tag = 'smem constant byte address 0x4 - core index']
  #allocation1 [shape = 'u32[144,128]{1,0:T(1,128)}', space=vmem, size = 0x12000, scoped, tag = 'internal scratch']
  #allocation2 [shape = 'f32[2,128]{1,0:T(2,128)}', space=vmem, size = 0x400, scoped, tag = 'scratch operand']
  %s0 = inlined_call_operand.vmem [shape: f32[2,2,128], index: 0, kind: input, shape index: {}]
  %s1 = inlined_call_operand.vmem [shape: f32[1,32], index: 1, kind: input, shape index: {}]
  %s2 = inlined_call_operand.vmem [shape: f32[1,32], index: 2, kind: input, shape index: {}]
  %s3 = inlined_call_operand.vmem [shape: f32[32,2], index: 3, kind: input, shape index: {}]
  %s4 = inlined_call_operand.vmem [shape: f32[1,2], index: 4, kind: input, shape index: {}]
  %s5 = inlined_call_operand.hbm [shape: f32[2,2], index: 5, kind: output, shape index: {}]
  %s6 = sld [smem:[#allocation0]]
  $region76: #{tpu_custom_call.1} parent=0
    _
  %s8 = ssub.s32 1, %s6
  %s9 = scalar_select 0, %s8, %s6
  $region1: #{tpu_custom_call.1} parent=0
    #allocation3 [shape = 'u8[8192]{0}', space=vmem, size = 0x2000, scoped, tag = 'input window, operand 0, single buffered']
    #allocation4 [shape = 'u8[1024]{0}', space=vmem, size = 0x400, scoped, tag = 'output window, operand 0, single buffered']
    #allocation5 [shape = 's32[1]{0}', space=sflag, size = 0x4, scoped, tag = 'scoped memory for tpu_custom_call.1']
    %10 = vsyncpa [#allocation5], 0
    // Predicated region
    $region2: #{tpu_custom_call.1} parent=1 // pred_check
      _
    $region3: #{tpu_custom_call.1} parent=1 // pred_check_branch
      %12 = sbr.rel (0) target = $region5
    $region4: #{tpu_custom_call.1} parent=1 // pred_region
      // Predicated region
      $region6: #{tpu_custom_call.1} parent=4 // pred_check
        _
      $region7: #{tpu_custom_call.1} parent=4 // pred_check_branch
        %14 = sbr.rel (0) target = $region9
      $region8: #{tpu_custom_call.1} parent=4 // pred_region
        // Predicated region
        $region10: #{tpu_custom_call.1} parent=8 // pred_check
          _
        $region11: #{tpu_custom_call.1} parent=8 // pred_check_branch
          %16 = sbr.rel target = $region13
        $region12: #{tpu_custom_call.1} parent=8 // pred_region
          // Predicated region
          $region25: #{tpu_custom_call.1} parent=12 // pred_check
            _
          $region26: #{tpu_custom_call.1} parent=12 // pred_check_branch
            %34 = sbr.rel (0) target = $region28
          $region27: #{tpu_custom_call.1} parent=12 // pred_region
            %s36 = ssub.s32 4, 1
            loop: start=0, step=1, limit=1
            $region29: #{tpu_custom_call.1} parent=27 // loop_pre_header
              _
            $region30: #{tpu_custom_call.1} parent=27 // loop_header
              %s38 = sphi 0, %s42
              %p39 = scmp.ge.s32.totalorder %s38, 1
              %s43 = sphi %s0, %s0
              %s44 = sphi [#allocation3], [#allocation3]
            $region31: #{tpu_custom_call.1} parent=27 // loop_header_branch
              %41 = sbr.rel (%p39) target = $region35
            $region32: #{tpu_custom_call.1} parent=27 // loop_body
              %v45 = vld [vmem:[%s43] sm:%s36]
              %46 = vst [vmem:[%s44] sm:%s36] %v45
              %v47 = vld [vmem:[%s43 + $0x2] sm:%s36]
              %48 = vst [vmem:[%s44 + $0x8] sm:%s36] %v47
            $region33: #{tpu_custom_call.1} parent=27 // loop_footer
              %s42 = sadd.s32 1, %s38
            $region34: #{tpu_custom_call.1} parent=27 // loop_footer_branch
              %37 = sbr.rel target = $region30
            $region35: #{tpu_custom_call.1} parent=27 // loop_exit
              _
          $region28: #{tpu_custom_call.1} parent=12 // pred_fallthru
            _
        $region13: #{tpu_custom_call.1} parent=8 // pred_fallthru
          _
        // Predicated region
        $region14: #{tpu_custom_call.1} parent=8 // pred_check
          _
        $region15: #{tpu_custom_call.1} parent=8 // pred_check_branch
          %18 = sbr.rel (0) target = $region17
        $region16: #{tpu_custom_call.1} parent=8 // pred_region
          %s20 = ssub.s32 4, 1
          loop: start=0, step=1, limit=1
          $region18: #{tpu_custom_call.1} parent=16 // loop_pre_header
            _
          $region19: #{tpu_custom_call.1} parent=16 // loop_header
            %s22 = sphi 0, %s26
            %p23 = scmp.ge.s32.totalorder %s22, 1
            %s27 = sphi %s0, %s0
            %s28 = sphi [#allocation3], [#allocation3]
          $region20: #{tpu_custom_call.1} parent=16 // loop_header_branch
            %25 = sbr.rel (%p23) target = $region24
          $region21: #{tpu_custom_call.1} parent=16 // loop_body
            %v29 = vld [vmem:[%s27] sm:%s20]
            %30 = vst [vmem:[%s28] sm:%s20] %v29
            %v31 = vld [vmem:[%s27 + $0x2] sm:%s20]
            %32 = vst [vmem:[%s28 + $0x8] sm:%s20] %v31
          $region22: #{tpu_custom_call.1} parent=16 // loop_footer
            %s26 = sadd.s32 1, %s22
          $region23: #{tpu_custom_call.1} parent=16 // loop_footer_branch
            %21 = sbr.rel target = $region19
          $region24: #{tpu_custom_call.1} parent=16 // loop_exit
            _
        $region17: #{tpu_custom_call.1} parent=8 // pred_fallthru
          _
      $region9: #{tpu_custom_call.1} parent=4 // pred_fallthru
        _
      %49 = vnop
    $region5: #{tpu_custom_call.1} parent=1 // pred_fallthru
      _
    // Predicated region
    $region36: #{tpu_custom_call.1} parent=1 // pred_check
      _
    $region37: #{tpu_custom_call.1} parent=1 // pred_check_branch
      %51 = sbr.rel (0) target = $region39
    $region38: #{tpu_custom_call.1} parent=1 // pred_region
      _
    $region39: #{tpu_custom_call.1} parent=1 // pred_fallthru
      _
    // Predicated region
    $region40: #{tpu_custom_call.1} parent=1 // pred_check
      _
    $region41: #{tpu_custom_call.1} parent=1 // pred_check_branch
      %53 = sbr.rel (0) target = $region43
    $region42: #{tpu_custom_call.1} parent=1 // pred_region
      _
    $region43: #{tpu_custom_call.1} parent=1 // pred_fallthru
      _
    // Predicated region
    $region44: #{tpu_custom_call.1} parent=1 // pred_check
      _
    $region45: #{tpu_custom_call.1} parent=1 // pred_check_branch
      %55 = sbr.rel (0) target = $region47
    $region46: #{tpu_custom_call.1} parent=1 // pred_region
      _
    $region47: #{tpu_custom_call.1} parent=1 // pred_fallthru
      _
    // Predicated region
    $region48: #{tpu_custom_call.1} parent=1 // pred_check
      _
    $region49: #{tpu_custom_call.1} parent=1 // pred_check_branch
      %57 = sbr.rel (0) target = $region51
    $region50: #{tpu_custom_call.1} parent=1 // pred_region
      _
    $region51: #{tpu_custom_call.1} parent=1 // pred_fallthru
      _
    // Predicated region
    $region52: #{tpu_custom_call.1} parent=1 // pred_check
      _
    $region53: #{tpu_custom_call.1} parent=1 // pred_check_branch
      %59 = sbr.rel (0) target = $region55
    $region54: #{tpu_custom_call.1} parent=1 // pred_region
      _
    $region55: #{tpu_custom_call.1} parent=1 // pred_fallthru
      _
    %p60 = scmp.eq.s32.totalorder 0, 0
    // Predicated region
    $region56: #{tpu_custom_call.1} parent=1 // pred_check
      %p61 = pneg %p60
    $region57: #{tpu_custom_call.1} parent=1 // pred_check_branch
      %63 = sbr.rel (%p61) target = $region59
    $region58: #{tpu_custom_call.1} parent=1 // pred_region
      %64 = vst [vmem:[#allocation2] sm:$0x3] 0.0
    $region59: #{tpu_custom_call.1} parent=1 // pred_fallthru
      _
    %p65 = scmp.ne.s32.totalorder 0, 0
    // Predicated region
    $region60: #{tpu_custom_call.1} parent=1 // pred_check
      %p66 = pneg %p65
    $region61: #{tpu_custom_call.1} parent=1 // pred_check_branch
      %68 = sbr.rel (%p66) target = $region63
    $region62: #{tpu_custom_call.1} parent=1 // pred_region
      %v69 = vld [vmem:[#allocation2] sm:$0x3]
      %v70 = vld [vmem:[#allocation3] sm:$0xff]
      %v71 = vld [vmem:[#allocation3 + $0x8] sm:$0xff]
      %v72 = vrot.slane %v70, 4
      %v73 = vadd.f32 %v70, %v72
      %v74 = vrot.slane %v73, 2
      %v75 = vadd.f32 %v73, %v74
      %v76 = vrot.slane %v75, 1
      %v77 = vadd.f32 %v75, %v76
      %v78 = vrot.slane %v71, 4
      %v79 = vadd.f32 %v71, %v78
      %v80 = vrot.slane %v79, 2
      %v81 = vadd.f32 %v79, %v80
      %v82 = vrot.slane %v81, 1
      %v83 = vadd.f32 %v81, %v82
      %vm86 = vcmask 1041409
      %v87 = vsel %vm86, %v83, %v77
      %v89 = vadd.f32 %v69, %v87
      %90 = vst [vmem:[#allocation2] sm:$0x3] %v89
    $region63: #{tpu_custom_call.1} parent=1 // pred_fallthru
      _
    // Predicated region
    $region64: #{tpu_custom_call.1} parent=1 // pred_check
      %p91 = pneg %p60
    $region65: #{tpu_custom_call.1} parent=1 // pred_check_branch
      %93 = sbr.rel (%p91) target = $region67
    $region66: #{tpu_custom_call.1} parent=1 // pred_region
      %v94 = vld [vmem:[#allocation2] sm:$0x3]
      %v95 = vld [vmem:[#allocation3] sm:$0x3]
      %v96 = vld [vmem:[#allocation3 + $0x8] sm:$0x3]
      %vm97 = vcmask 1041408
      %v98 = vsel %vm97, %v95, 0.0
      %v99 = vrot.slane %v98, 4
      %v100 = vadd.f32 %v98, %v99
      %v101 = vrot.slane %v100, 2
      %v102 = vadd.f32 %v100, %v101
      %v103 = vrot.slane %v102, 1
      %v104 = vadd.f32 %v102, %v103
      %v105 = vsel %vm97, %v96, 0.0
      %v106 = vrot.slane %v105, 4
      %v107 = vadd.f32 %v105, %v106
      %v108 = vrot.slane %v107, 2
      %v109 = vadd.f32 %v107, %v108
      %v110 = vrot.slane %v109, 1
      %v111 = vadd.f32 %v109, %v110
      %vm114 = vcmask 1041409
      %v115 = vsel %vm114, %v111, %v104
      %v117 = vadd.f32 %v94, %v115
      %118 = vst [vmem:[#allocation2] sm:$0x3] %v117
      %v119 = vld [vmem:[#allocation2] sm:$0x3]
      %121 = vrot.lane.b32.xlu0 %v119, 96
      %v122 = vpop.permute.xlu0 %121
      %v124 = vadd.f32 %v119, %v122
      %125 = vrot.lane.b32.xlu0 %v119, 64
      %v126 = vpop.permute.xlu0 %125
      %v128 = vadd.f32 %v124, %v126
      %129 = vrot.lane.b32.xlu0 %v119, 32
      %v130 = vpop.permute.xlu0 %129
      %v132 = vadd.f32 %v128, %v130
      %v133 = vmul.f32 %v132, 0.125
      %vm134 = vcmask 254976
      %v135 = vsel %vm134, %v133, 0.0
      %136 = vadd.xlane.f32.xlu0 %v135
      %v137 = vpop.xlane.xlu0 %136
      %v138 = vrcp.pop 32.0
      %v139 = vmul.f32 %v137, %v138
      %v140 = vsub.f32 %v133, %v139
      %v141 = vmul.f32 %v140, %v140
      %v142 = vsel %vm134, %v141, 0.0
      %143 = vadd.xlane.f32.xlu0 %v142
      %v144 = vpop.xlane.xlu0 %143
      %v145 = vmul.f32 %v144, %v138
      %v146 = vadd.f32 %v145, 1e-05
      %v147 = vrsqrt.pop %v146
      %v148 = vmul.f32 %v140, %v147
      %v149 = vld [vmem:[%s1] sm:$0x1]
      %v151 = vlaneseq
      %v152 = vshrl.u32 %v151, 7
      %v153 = vsub.s32 0, %v152
      %v154 = vrot.slane %v149, %v153
      %v156 = vmul.f32 %v148, %v154
      %v157 = vld [vmem:[%s2] sm:$0x1]
      %v159 = vlaneseq
      %v160 = vshrl.u32 %v159, 7
      %v161 = vsub.s32 0, %v160
      %v162 = vrot.slane %v157, %v161
      %v164 = vadd.f32 %v156, %v162
      %v165 = vld [vmem:[%s3] sm:$0xff]
      %v166 = vld [vmem:[%s3 + $0x8] sm:$0xff]
      %v167 = vld [vmem:[%s3 + $0x10] sm:$0xff]
      %v168 = vld [vmem:[%s3 + $0x18] sm:$0xff]
      %v169 = vld [vmem:[%s4] sm:$0x1]
      %v171 = vlaneseq
      %v172 = vshrl.u32 %v171, 7
      %v173 = vsub.s32 0, %v172
      %v174 = vrot.slane %v169, %v173
      %vm176 = vcmask 261120
      %v178 = vsel %vm176, %v164, 0
      %180 = vmatprep.subr.mxu0 0.0
      %181 = vmatpush1.msra.mxu0 0.0
      %182 = vmatprep.subr.mxu0 0.0
      %183 = vmatpush1.msra.mxu0 0.0
      %184 = vmatprep.subr.mxu0 0.0
      %185 = vmatpush1.msra.mxu0 0.0
      %186 = vmatprep.subr.mxu0 0.0
      %187 = vmatpush1.msra.mxu0 0.0
      %188 = vmatprep.subr.mxu0 0.0
      %189 = vmatpush1.msra.mxu0 0.0
      %190 = vmatprep.subr.mxu0 0.0
      %191 = vmatpush1.msra.mxu0 0.0
      %192 = vmatprep.subr.mxu0 0.0
      %193 = vmatpush1.msra.mxu0 0.0
      %194 = vmatprep.subr.mxu0 0.0
      %195 = vmatpush1.msra.mxu0 0.0
      %196 = vmatprep.subr.mxu0 0.0
      %197 = vmatpush1.msra.mxu0 0.0
      %198 = vmatprep.subr.mxu0 0.0
      %199 = vmatpush1.msra.mxu0 0.0
      %200 = vmatprep.subr.mxu0 0.0
      %201 = vmatpush1.msra.mxu0 0.0
      %202 = vmatprep.subr.mxu0 0.0
      %203 = vmatpush1.msra.mxu0 0.0
      %204 = vmatprep.subr.mxu0 0.0
      %205 = vmatpush1.msra.mxu0 %v168
      %206 = vmatprep.subr.mxu0 0.0
      %207 = vmatpush1.msra.mxu0 %v167
      %208 = vmatprep.subr.mxu0 0.0
      %209 = vmatpush1.msra.mxu0 %v166
      %210 = vmatprep.subr.mxu0 0.0
      %211 = vmatpush1.msra.mxu0 %v165
      %212 = vmatprep.subr.mxu0 0.0
      %213 = vmatpush2.msra.mxu0 0.0
      %214 = vmatprep.subr.mxu0 0.0
      %215 = vmatpush2.msra.mxu0 0.0
      %216 = vmatprep.subr.mxu0 0.0
      %217 = vmatpush2.msra.mxu0 0.0
      %218 = vmatprep.subr.mxu0 0.0
      %219 = vmatpush2.msra.mxu0 0.0
      %220 = vmatprep.subr.mxu0 0.0
      %221 = vmatpush2.msra.mxu0 0.0
      %222 = vmatprep.subr.mxu0 0.0
      %223 = vmatpush2.msra.mxu0 0.0
      %224 = vmatprep.subr.mxu0 0.0
      %225 = vmatpush2.msra.mxu0 0.0
      %226 = vmatprep.subr.mxu0 0.0
      %227 = vmatpush2.msra.mxu0 0.0
      %228 = vmatprep.subr.mxu0 0.0
      %229 = vmatpush2.msra.mxu0 0.0
      %230 = vmatprep.subr.mxu0 0.0
      %231 = vmatpush2.msra.mxu0 0.0
      %232 = vmatprep.subr.mxu0 0.0
      %233 = vmatpush2.msra.mxu0 0.0
      %234 = vmatprep.subr.mxu0 0.0
      %235 = vmatpush2.msra.mxu0 0.0
      %236 = vmatprep.subr.mxu0 0.0
      %237 = vmatpush2.msra.mxu0 0.0
      %238 = vmatprep.subr.mxu0 0.0
      %239 = vmatpush2.msra.mxu0 0.0
      %240 = vmatprep.subr.mxu0 0.0
      %241 = vmatpush2.msra.mxu0 0.0
      %242 = vmatprep.subr.mxu0 0.0
      %243 = vmatpush2.msra.mxu0 0.0
      %244 = vmatprep.mubr.f32.mxu0 0.0
      %245 = vmatmul.mubr.f32.gmra.mxu0 %v178
      %v246 = vpop.f32.mrf.mxu0
      %v247 = vadd.f32 %v174, %v246
      %v248 = vpop.f32.mrf.mxu0
      %249 = vdwg.mxu0
      %vm250 = vcmask 9216
      %251 = vst.msk [vmem:[#allocation4] sm:$0x3] %vm250, %v247
    $region67: #{tpu_custom_call.1} parent=1 // pred_fallthru
      _
    // Predicated region
    $region68: #{tpu_custom_call.1} parent=1 // pred_check
      _
    $region69: #{tpu_custom_call.1} parent=1 // pred_check_branch
      %253 = sbr.rel (0) target = $region71
    $region70: #{tpu_custom_call.1} parent=1 // pred_region
      %s255 = ssub.s32 32, 32
      %256 = vsyncadd [#allocation5], %s255
      %s258 = sshll.u32 [#allocation4], 4
      %s259 = int_to_ptr.vmem [resolvable:$true] %s258
      %261 = dma.vmem_to_hbm [thread:$0]  %s259, 32, %s5, [#allocation5]
    $region71: #{tpu_custom_call.1} parent=1 // pred_fallthru
      _
    // Predicated region
    $region72: #{tpu_custom_call.1} parent=1 // pred_check
      _
    $region73: #{tpu_custom_call.1} parent=1 // pred_check_branch
      %263 = sbr.rel (0) target = $region75
    $region74: #{tpu_custom_call.1} parent=1 // pred_region
      %264 = dma.done [#allocation5], 32
    $region75: #{tpu_custom_call.1} parent=1 // pred_fallthru
      _
    %265 = vsyncpa [#allocation5], 1

</llo_original>
